<compile_context>
chip_gen: v7x
topology: tpu7x:2x2x1
jax: 0.10.0
libtpu: 0.0.40
codegen_flags: <defaults>
</compile_context>

<pallas_src>
import jax
import jax.numpy as jnp
from jax import lax
from jax.experimental import pallas as pl
from jax.experimental.pallas import tpu as pltpu

# Norm-aware scaling-and-squaring parameters for standard-normal (dim<=~64) W.
_SQUARINGS = 7          # scale W by 2^-7 before the Taylor series
# Taylor order is fixed at 8 (Paterson-Stockmeyer evaluation below).

# 1/k! for k = 0..8
_C = (1.0, 1.0, 1.0 / 2, 1.0 / 6, 1.0 / 24, 1.0 / 120,
      1.0 / 720, 1.0 / 5040, 1.0 / 40320)


def _quantum_gate_kernel(w_ref, x_ref, o_ref):
    """Compute U = expm(W) and out = x @ U^T entirely in VMEM."""
    dim = w_ref.shape[0]

    def mm(p, q):
        return jnp.dot(p, q, preferred_element_type=jnp.float32)

    # --- scaling: A = W / 2^s ---
    a = w_ref[...].astype(jnp.float32) * jnp.float32(1.0 / (2.0 ** _SQUARINGS))

    # --- degree-8 Taylor via Paterson-Stockmeyer (4 matmuls total) ---
    # p(A) = B0 + B1 @ A^4, with
    #   B0 = I + A + A^2/2! + A^3/3!
    #   B1 = I/4! + A/5! + A^2/6! + A^3/7! + A^4/8!
    a2 = mm(a, a)
    a3 = mm(a2, a)          # independent of a4 -> MXU latency overlap
    a4 = mm(a2, a2)

    eye = jnp.eye(dim, dtype=jnp.float32)
    b0 = eye + a + jnp.float32(_C[2]) * a2 + jnp.float32(_C[3]) * a3
    b1 = (jnp.float32(_C[4]) * eye
          + jnp.float32(_C[5]) * a
          + jnp.float32(_C[6]) * a2
          + jnp.float32(_C[7]) * a3
          + jnp.float32(_C[8]) * a4)
    u = b0 + mm(b1, a4)

    # --- repeated squaring: U <- U^2, _SQUARINGS times (f32 throughout) ---
    for _ in range(_SQUARINGS):
        u = mm(u, u)

    # --- apply gate: out[b, i] = sum_j U[i, j] * x[b, j]  (== x @ U^T) ---
    x = x_ref[...].astype(jnp.float32)
    out = lax.dot_general(
        x, u,
        dimension_numbers=(((1,), (1,)), ((), ())),
        preferred_element_type=jnp.float32,
    )
    o_ref[...] = out.astype(o_ref.dtype)


def quantum_gate_layer(w, x):
    """Pallas wrapper.  w: (dim, dim) parameter, x: (batch, dim)."""
    batch, dim = x.shape
    assert w.shape == (dim, dim)
    # No grid: single invocation, full arrays resident in VMEM (few KiB).
    return pl.pallas_call(
        _quantum_gate_kernel,
        out_shape=jax.ShapeDtypeStruct((batch, dim), jnp.float32),
        in_specs=[
            pl.BlockSpec(memory_space=pltpu.MemorySpace.VMEM),
            pl.BlockSpec(memory_space=pltpu.MemorySpace.VMEM),
        ],
        out_specs=pl.BlockSpec(memory_space=pltpu.MemorySpace.VMEM),
    )(w, x)


if __name__ == "__main__":
    key = jax.random.PRNGKey(0)
    k_w, k_x = jax.random.split(key)

    dim = 32
    batch = 8

    # Deterministic parameter init matching nn.Parameter(torch.randn(dim, dim)).
    w = jax.random.normal(k_w, (dim, dim), dtype=jnp.float32)
    x = jax.random.normal(k_x, (batch, dim), dtype=jnp.float32)

    out = quantum_gate_layer(w, x)
    out = jax.block_until_ready(out)

    # Reference: expm via jax.scipy, then out_ref = x @ expm(W)^T
    u_ref = jax.scipy.linalg.expm(w)
    ref = x @ u_ref.T
    err = jnp.max(jnp.abs(out - ref))
    scale = 1.0 + jnp.max(jnp.abs(ref))
    assert float(err) <= 1e-2 * float(scale), f"mismatch: err={err}, scale={scale}"

    print("KERNEL_OK")
</pallas_src>

<mosaic_0001>
module attributes {stable_mosaic.version = 11 : i64} {
  func.func @_quantum_gate_kernel(%arg0: memref<32x32xf32, #tpu.memory_space<vmem>>, %arg1: memref<8x32xf32, #tpu.memory_space<vmem>>, %arg2: memref<8x32xf32, #tpu.memory_space<vmem>>) attributes {dimension_semantics = [], scalar_prefetch = 0 : i64, scratch_operands = 0 : i64, tpu.core_type = #tpu.core_type<tc>} {
    %c0 = arith.constant 0 : index
    %c0_0 = arith.constant 0 : index
    %0 = vector.load %arg0[%c0, %c0_0] : memref<32x32xf32, #tpu.memory_space<vmem>>, vector<32x32xf32>
    %cst = arith.constant 7.812500e-03 : f32
    %1 = vector.broadcast %cst : f32 to vector<32x32xf32>
    %2 = arith.mulf %0, %1 : vector<32x32xf32>
    %cst_1 = arith.constant dense<0.000000e+00> : vector<32x32xf32>
    %3 = tpu.matmul %2, %2, %cst_1 {dimension_numbers = #tpu.dot_dimension_numbers<[1], [0], [0], [1], [0, 0, 1, 1], [], []>} : vector<32x32xf32>, vector<32x32xf32>, vector<32x32xf32> -> vector<32x32xf32>
    %cst_2 = arith.constant dense<0.000000e+00> : vector<32x32xf32>
    %4 = tpu.matmul %3, %2, %cst_2 {dimension_numbers = #tpu.dot_dimension_numbers<[1], [0], [0], [1], [0, 0, 1, 1], [], []>} : vector<32x32xf32>, vector<32x32xf32>, vector<32x32xf32> -> vector<32x32xf32>
    %cst_3 = arith.constant dense<0.000000e+00> : vector<32x32xf32>
    %5 = tpu.matmul %3, %3, %cst_3 {dimension_numbers = #tpu.dot_dimension_numbers<[1], [0], [0], [1], [0, 0, 1, 1], [], []>} : vector<32x32xf32>, vector<32x32xf32>, vector<32x32xf32> -> vector<32x32xf32>
    %6 = tpu.iota {dimensions = array<i32: 0>} : vector<32x32xi32>
    %7 = tpu.iota {dimensions = array<i32: 1>} : vector<32x32xi32>
    %c0_i32 = arith.constant 0 : i32
    %8 = vector.broadcast %c0_i32 : i32 to vector<32x32xi32>
    %9 = arith.addi %6, %8 : vector<32x32xi32>
    %10 = arith.cmpi eq, %9, %7 : vector<32x32xi32>
    %11 = arith.extui %10 : vector<32x32xi1> to vector<32x32xi32>
    %12 = arith.sitofp %11 : vector<32x32xi32> to vector<32x32xf32>
    %13 = arith.addf %12, %2 : vector<32x32xf32>
    %cst_4 = arith.constant 5.000000e-01 : f32
    %14 = vector.broadcast %cst_4 : f32 to vector<32x32xf32>
    %15 = arith.mulf %14, %3 : vector<32x32xf32>
    %16 = arith.addf %13, %15 : vector<32x32xf32>
    %cst_5 = arith.constant 0.166666672 : f32
    %17 = vector.broadcast %cst_5 : f32 to vector<32x32xf32>
    %18 = arith.mulf %17, %4 : vector<32x32xf32>
    %19 = arith.addf %16, %18 : vector<32x32xf32>
    %cst_6 = arith.constant 0.0416666679 : f32
    %20 = vector.broadcast %cst_6 : f32 to vector<32x32xf32>
    %21 = arith.mulf %20, %12 : vector<32x32xf32>
    %cst_7 = arith.constant 0.00833333377 : f32
    %22 = vector.broadcast %cst_7 : f32 to vector<32x32xf32>
    %23 = arith.mulf %22, %2 : vector<32x32xf32>
    %24 = arith.addf %21, %23 : vector<32x32xf32>
    %cst_8 = arith.constant 0.00138888892 : f32
    %25 = vector.broadcast %cst_8 : f32 to vector<32x32xf32>
    %26 = arith.mulf %25, %3 : vector<32x32xf32>
    %27 = arith.addf %24, %26 : vector<32x32xf32>
    %cst_9 = arith.constant 1.98412701E-4 : f32
    %28 = vector.broadcast %cst_9 : f32 to vector<32x32xf32>
    %29 = arith.mulf %28, %4 : vector<32x32xf32>
    %30 = arith.addf %27, %29 : vector<32x32xf32>
    %cst_10 = arith.constant 2.48015876E-5 : f32
    %31 = vector.broadcast %cst_10 : f32 to vector<32x32xf32>
    %32 = arith.mulf %31, %5 : vector<32x32xf32>
    %33 = arith.addf %30, %32 : vector<32x32xf32>
    %cst_11 = arith.constant dense<0.000000e+00> : vector<32x32xf32>
    %34 = tpu.matmul %33, %5, %cst_11 {dimension_numbers = #tpu.dot_dimension_numbers<[1], [0], [0], [1], [0, 0, 1, 1], [], []>} : vector<32x32xf32>, vector<32x32xf32>, vector<32x32xf32> -> vector<32x32xf32>
    %35 = arith.addf %19, %34 : vector<32x32xf32>
    %cst_12 = arith.constant dense<0.000000e+00> : vector<32x32xf32>
    %36 = tpu.matmul %35, %35, %cst_12 {dimension_numbers = #tpu.dot_dimension_numbers<[1], [0], [0], [1], [0, 0, 1, 1], [], []>} : vector<32x32xf32>, vector<32x32xf32>, vector<32x32xf32> -> vector<32x32xf32>
    %cst_13 = arith.constant dense<0.000000e+00> : vector<32x32xf32>
    %37 = tpu.matmul %36, %36, %cst_13 {dimension_numbers = #tpu.dot_dimension_numbers<[1], [0], [0], [1], [0, 0, 1, 1], [], []>} : vector<32x32xf32>, vector<32x32xf32>, vector<32x32xf32> -> vector<32x32xf32>
    %cst_14 = arith.constant dense<0.000000e+00> : vector<32x32xf32>
    %38 = tpu.matmul %37, %37, %cst_14 {dimension_numbers = #tpu.dot_dimension_numbers<[1], [0], [0], [1], [0, 0, 1, 1], [], []>} : vector<32x32xf32>, vector<32x32xf32>, vector<32x32xf32> -> vector<32x32xf32>
    %cst_15 = arith.constant dense<0.000000e+00> : vector<32x32xf32>
    %39 = tpu.matmul %38, %38, %cst_15 {dimension_numbers = #tpu.dot_dimension_numbers<[1], [0], [0], [1], [0, 0, 1, 1], [], []>} : vector<32x32xf32>, vector<32x32xf32>, vector<32x32xf32> -> vector<32x32xf32>
    %cst_16 = arith.constant dense<0.000000e+00> : vector<32x32xf32>
    %40 = tpu.matmul %39, %39, %cst_16 {dimension_numbers = #tpu.dot_dimension_numbers<[1], [0], [0], [1], [0, 0, 1, 1], [], []>} : vector<32x32xf32>, vector<32x32xf32>, vector<32x32xf32> -> vector<32x32xf32>
    %cst_17 = arith.constant dense<0.000000e+00> : vector<32x32xf32>
    %41 = tpu.matmul %40, %40, %cst_17 {dimension_numbers = #tpu.dot_dimension_numbers<[1], [0], [0], [1], [0, 0, 1, 1], [], []>} : vector<32x32xf32>, vector<32x32xf32>, vector<32x32xf32> -> vector<32x32xf32>
    %cst_18 = arith.constant dense<0.000000e+00> : vector<32x32xf32>
    %42 = tpu.matmul %41, %41, %cst_18 {dimension_numbers = #tpu.dot_dimension_numbers<[1], [0], [0], [1], [0, 0, 1, 1], [], []>} : vector<32x32xf32>, vector<32x32xf32>, vector<32x32xf32> -> vector<32x32xf32>
    %c0_19 = arith.constant 0 : index
    %c0_20 = arith.constant 0 : index
    %43 = vector.load %arg1[%c0_19, %c0_20] : memref<8x32xf32, #tpu.memory_space<vmem>>, vector<8x32xf32>
    %cst_21 = arith.constant dense<0.000000e+00> : vector<8x32xf32>
    %44 = tpu.matmul %43, %42, %cst_21 {dimension_numbers = #tpu.dot_dimension_numbers<[1], [1], [0], [0], [0, 0, 1, 0], [], []>} : vector<8x32xf32>, vector<32x32xf32>, vector<8x32xf32> -> vector<8x32xf32>
    %c0_22 = arith.constant 0 : index
    %c0_23 = arith.constant 0 : index
    %45 = vector.load %arg2[%c0_22, %c0_23] : memref<8x32xf32, #tpu.memory_space<vmem>>, vector<8x32xf32>
    tpu.vector_store %arg2[%c0_22, %c0_23], %44 {strides = array<i32>} : memref<8x32xf32, #tpu.memory_space<vmem>>, vector<8x32xf32>,
    return
  }
}

</mosaic_0001>

<llo_original>
// kernel: tpu_custom_call.1
$region0: #{tpu_custom_call.1}
  #allocation0 [shape = 'u32[]', space=smem, size = 0x4, offset = 0x4, fixed_abs, tag = 'smem constant byte address 0x4 - core index']
  #allocation1 [shape = 'u32[144,128]{1,0:T(1,128)}', space=vmem, size = 0x12000, scoped, tag = 'internal scratch']
  %s0 = inlined_call_operand.hbm [shape: f32[32,32], index: 0, kind: input, shape index: {}]
  %s1 = inlined_call_operand.hbm [shape: f32[8,32], index: 1, kind: input, shape index: {}]
  %s2 = inlined_call_operand.hbm [shape: f32[8,32], index: 2, kind: output, shape index: {}]
  %s3 = sld [smem:[#allocation0]]
  $region26: #{tpu_custom_call.1} parent=0
    _
  %s5 = ssub.s32 1, %s3
  %s6 = scalar_select 0, %s5, %s3
  $region1: #{tpu_custom_call.1} parent=0
    #allocation2 [shape = 'u8[16384]{0}', space=vmem, size = 0x4000, scoped, tag = 'input window, operand 0, single buffered']
    #allocation3 [shape = 's32[1]{0}', space=sflag, size = 0x4, scoped, tag = 'scoped memory for tpu_custom_call.1']
    #allocation4 [shape = 's32[1]{0}', space=sflag, size = 0x4, scoped, tag = 'scoped memory for tpu_custom_call.1']
    #allocation5 [shape = 'u8[4096]{0}', space=vmem, size = 0x1000, scoped, tag = 'input window, operand 1, single buffered']
    #allocation6 [shape = 's32[1]{0}', space=sflag, size = 0x4, scoped, tag = 'scoped memory for tpu_custom_call.1']
    #allocation7 [shape = 'u8[4096]{0}', space=vmem, size = 0x1000, scoped, tag = 'output window, operand 0, single buffered']
    %7 = vsyncpa [#allocation3], 0
    %8 = vsyncpa [#allocation6], 0
    %9 = vsyncpa [#allocation4], 0
    // Predicated region
    $region2: #{tpu_custom_call.1} parent=1 // pred_check
      _
    $region3: #{tpu_custom_call.1} parent=1 // pred_check_branch
      %11 = sbr.rel (0) target = $region5
    $region4: #{tpu_custom_call.1} parent=1 // pred_region
      %s13 = ssub.s32 512, 512
      %14 = vsyncadd [#allocation3], %s13
      %s15 = sshll.u32 [#allocation2], 4
      %s16 = int_to_ptr.vmem [resolvable:$true] %s15
      %21 = dma.hbm_to_vmem [thread:$0]  %s0, 512, %s16, [#allocation3], 128, 128, 8
    $region5: #{tpu_custom_call.1} parent=1 // pred_fallthru
      _
    // Predicated region
    $region6: #{tpu_custom_call.1} parent=1 // pred_check
      _
    $region7: #{tpu_custom_call.1} parent=1 // pred_check_branch
      %23 = sbr.rel (0) target = $region9
    $region8: #{tpu_custom_call.1} parent=1 // pred_region
      %s25 = ssub.s32 128, 128
      %26 = vsyncadd [#allocation6], %s25
      %s28 = sshll.u32 [#allocation5], 4
      %s29 = int_to_ptr.vmem [resolvable:$true] %s28
      %31 = dma.hbm_to_vmem [thread:$0]  %s1, 128, %s29, [#allocation6]
    $region9: #{tpu_custom_call.1} parent=1 // pred_fallthru
      _
    // Predicated region
    $region10: #{tpu_custom_call.1} parent=1 // pred_check
      _
    $region11: #{tpu_custom_call.1} parent=1 // pred_check_branch
      %33 = sbr.rel (0) target = $region13
    $region12: #{tpu_custom_call.1} parent=1 // pred_region
      %34 = dma.done [#allocation3], 512
    $region13: #{tpu_custom_call.1} parent=1 // pred_fallthru
      _
    // Predicated region
    $region14: #{tpu_custom_call.1} parent=1 // pred_check
      _
    $region15: #{tpu_custom_call.1} parent=1 // pred_check_branch
      %36 = sbr.rel (0) target = $region17
    $region16: #{tpu_custom_call.1} parent=1 // pred_region
      %37 = dma.done [#allocation6], 128
    $region17: #{tpu_custom_call.1} parent=1 // pred_fallthru
      _
    %v38 = vld [vmem:[#allocation2] sm:$0xff]
    %v39 = vld [vmem:[#allocation2 + $0x8] sm:$0xff]
    %v40 = vld [vmem:[#allocation2 + $0x10] sm:$0xff]
    %v41 = vld [vmem:[#allocation2 + $0x18] sm:$0xff]
    %v42 = vmul.f32 %v38, 0.0078125
    %v43 = vmul.f32 %v39, 0.0078125
    %v44 = vmul.f32 %v40, 0.0078125
    %v45 = vmul.f32 %v41, 0.0078125
    %vm46 = vcmask 261120
    %v48 = vsel %vm46, %v42, 0
    %v51 = vsel %vm46, %v43, 0
    %v54 = vsel %vm46, %v44, 0
    %v57 = vsel %vm46, %v45, 0
    %59 = vmatprep.subr.mxu0 0.0
    %60 = vmatpush1.msra.mxu0 %v42
    %61 = vmatprep.subr.mxu0 0.0
    %62 = vmatpush1.msra.mxu0 %v43
    %63 = vmatprep.subr.mxu0 0.0
    %64 = vmatpush1.msra.mxu0 %v44
    %65 = vmatprep.subr.mxu0 0.0
    %66 = vmatpush1.msra.mxu0 %v45
    %67 = vmatprep.subr.mxu0 0.0
    %68 = vmatpush1.msra.mxu0 0.0
    %69 = vmatprep.subr.mxu0 0.0
    %70 = vmatpush1.msra.mxu0 0.0
    %71 = vmatprep.subr.mxu0 0.0
    %72 = vmatpush1.msra.mxu0 0.0
    %73 = vmatprep.subr.mxu0 0.0
    %74 = vmatpush1.msra.mxu0 0.0
    %75 = vmatprep.subr.mxu0 0.0
    %76 = vmatpush1.msra.mxu0 0.0
    %77 = vmatprep.subr.mxu0 0.0
    %78 = vmatpush1.msra.mxu0 0.0
    %79 = vmatprep.subr.mxu0 0.0
    %80 = vmatpush1.msra.mxu0 0.0
    %81 = vmatprep.subr.mxu0 0.0
    %82 = vmatpush1.msra.mxu0 0.0
    %83 = vmatprep.subr.mxu0 0.0
    %84 = vmatpush1.msra.mxu0 0.0
    %85 = vmatprep.subr.mxu0 0.0
    %86 = vmatpush1.msra.mxu0 0.0
    %87 = vmatprep.subr.mxu0 0.0
    %88 = vmatpush1.msra.mxu0 0.0
    %89 = vmatprep.subr.mxu0 0.0
    %90 = vmatpush1.msra.mxu0 0.0
    %91 = vmatprep.subr.mxu0 0.0
    %92 = vmatpush1.msra.mxu0 0.0
    %93 = vmatprep.subr.mxu0 0.0
    %94 = vmatpush1.msra.mxu0 0.0
    %95 = vmatprep.subr.mxu0 0.0
    %96 = vmatpush1.msra.mxu0 0.0
    %97 = vmatprep.subr.mxu0 0.0
    %98 = vmatpush1.msra.mxu0 0.0
    %99 = vmatprep.subr.mxu0 0.0
    %100 = vmatpush1.msra.mxu0 0.0
    %101 = vmatprep.subr.mxu0 0.0
    %102 = vmatpush1.msra.mxu0 0.0
    %103 = vmatprep.subr.mxu0 0.0
    %104 = vmatpush1.msra.mxu0 0.0
    %105 = vmatprep.subr.mxu0 0.0
    %106 = vmatpush1.msra.mxu0 0.0
    %107 = vmatprep.subr.mxu0 0.0
    %108 = vmatpush1.msra.mxu0 0.0
    %109 = vmatprep.subr.mxu0 0.0
    %110 = vmatpush1.msra.mxu0 0.0
    %111 = vmatprep.subr.mxu0 0.0
    %112 = vmatpush1.msra.mxu0 0.0
    %113 = vmatprep.subr.mxu0 0.0
    %114 = vmatpush1.msra.mxu0 0.0
    %115 = vmatprep.subr.mxu0 0.0
    %116 = vmatpush1.msra.mxu0 0.0
    %117 = vmatprep.subr.mxu0 0.0
    %118 = vmatpush1.msra.mxu0 0.0
    %119 = vmatprep.subr.mxu0 0.0
    %120 = vmatpush1.msra.mxu0 0.0
    %121 = vmatprep.subr.mxu0 0.0
    %122 = vmatpush1.msra.mxu0 0.0
    %123 = vmatprep.mubr.f32.mxu0 0.0
    %124 = vmatmul.mubr.f32.gmra.mrb[0].mxu0 %v48
    %v125 = vpop.f32.mrb[0].mxu0
    %v126 = vadd.f32 0.0, %v125
    %v127 = vpop.f32.mrb[0].mxu0
    %128 = vmatprep.mubr.f32.mxu0 0.0
    %129 = vmatmul.mubr.f32.gmra.mrb[0].mxu0 %v51
    %v130 = vpop.f32.mrb[0].mxu0
    %v131 = vadd.f32 0.0, %v130
    %v132 = vpop.f32.mrb[0].mxu0
    %133 = vmatprep.mubr.f32.mxu0 0.0
    %134 = vmatmul.mubr.f32.gmra.mrb[0].mxu0 %v54
    %v135 = vpop.f32.mrb[0].mxu0
    %v136 = vadd.f32 0.0, %v135
    %v137 = vpop.f32.mrb[0].mxu0
    %138 = vmatprep.mubr.f32.mxu0 0.0
    %139 = vmatmul.mubr.f32.gmra.mrb[0].mxu0 %v57
    %v140 = vpop.f32.mrb[0].mxu0
    %v141 = vadd.f32 0.0, %v140
    %v142 = vpop.f32.mrb[0].mxu0
    %143 = vdwg.mxu0
    %v145 = vsel %vm46, %v126, 0
    %v148 = vsel %vm46, %v131, 0
    %v151 = vsel %vm46, %v136, 0
    %v154 = vsel %vm46, %v141, 0
    %156 = vmatprep.subr.mxu0 0.0
    %157 = vmatpush1.msra.mxu0 %v42
    %158 = vmatprep.subr.mxu0 0.0
    %159 = vmatpush1.msra.mxu0 %v43
    %160 = vmatprep.subr.mxu0 0.0
    %161 = vmatpush1.msra.mxu0 %v44
    %162 = vmatprep.subr.mxu0 0.0
    %163 = vmatpush1.msra.mxu0 %v45
    %164 = vmatprep.subr.mxu0 0.0
    %165 = vmatpush1.msra.mxu0 0.0
    %166 = vmatprep.subr.mxu0 0.0
    %167 = vmatpush1.msra.mxu0 0.0
    %168 = vmatprep.subr.mxu0 0.0
    %169 = vmatpush1.msra.mxu0 0.0
    %170 = vmatprep.subr.mxu0 0.0
    %171 = vmatpush1.msra.mxu0 0.0
    %172 = vmatprep.subr.mxu0 0.0
    %173 = vmatpush1.msra.mxu0 0.0
    %174 = vmatprep.subr.mxu0 0.0
    %175 = vmatpush1.msra.mxu0 0.0
    %176 = vmatprep.subr.mxu0 0.0
    %177 = vmatpush1.msra.mxu0 0.0
    %178 = vmatprep.subr.mxu0 0.0
    %179 = vmatpush1.msra.mxu0 0.0
    %180 = vmatprep.subr.mxu0 0.0
    %181 = vmatpush1.msra.mxu0 0.0
    %182 = vmatprep.subr.mxu0 0.0
    %183 = vmatpush1.msra.mxu0 0.0
    %184 = vmatprep.subr.mxu0 0.0
    %185 = vmatpush1.msra.mxu0 0.0
    %186 = vmatprep.subr.mxu0 0.0
    %187 = vmatpush1.msra.mxu0 0.0
    %188 = vmatprep.subr.mxu0 0.0
    %189 = vmatpush1.msra.mxu0 0.0
    %190 = vmatprep.subr.mxu0 0.0
    %191 = vmatpush1.msra.mxu0 0.0
    %192 = vmatprep.subr.mxu0 0.0
    %193 = vmatpush1.msra.mxu0 0.0
    %194 = vmatprep.subr.mxu0 0.0
    %195 = vmatpush1.msra.mxu0 0.0
    %196 = vmatprep.subr.mxu0 0.0
    %197 = vmatpush1.msra.mxu0 0.0
    %198 = vmatprep.subr.mxu0 0.0
    %199 = vmatpush1.msra.mxu0 0.0
    %200 = vmatprep.subr.mxu0 0.0
    %201 = vmatpush1.msra.mxu0 0.0
    %202 = vmatprep.subr.mxu0 0.0
    %203 = vmatpush1.msra.mxu0 0.0
    %204 = vmatprep.subr.mxu0 0.0
    %205 = vmatpush1.msra.mxu0 0.0
    %206 = vmatprep.subr.mxu0 0.0
    %207 = vmatpush1.msra.mxu0 0.0
    %208 = vmatprep.subr.mxu0 0.0
    %209 = vmatpush1.msra.mxu0 0.0
    %210 = vmatprep.subr.mxu0 0.0
    %211 = vmatpush1.msra.mxu0 0.0
    %212 = vmatprep.subr.mxu0 0.0
    %213 = vmatpush1.msra.mxu0 0.0
    %214 = vmatprep.subr.mxu0 0.0
    %215 = vmatpush1.msra.mxu0 0.0
    %216 = vmatprep.subr.mxu0 0.0
    %217 = vmatpush1.msra.mxu0 0.0
    %218 = vmatprep.subr.mxu0 0.0
    %219 = vmatpush1.msra.mxu0 0.0
    %220 = vmatprep.mubr.f32.mxu0 0.0
    %221 = vmatmul.mubr.f32.gmra.mrb[0].mxu0 %v145
    %v222 = vpop.f32.mrb[0].mxu0
    %v223 = vadd.f32 0.0, %v222
    %v224 = vpop.f32.mrb[0].mxu0
    %225 = vmatprep.mubr.f32.mxu0 0.0
    %226 = vmatmul.mubr.f32.gmra.mrb[0].mxu0 %v148
    %v227 = vpop.f32.mrb[0].mxu0
    %v228 = vadd.f32 0.0, %v227
    %v229 = vpop.f32.mrb[0].mxu0
    %230 = vmatprep.mubr.f32.mxu0 0.0
    %231 = vmatmul.mubr.f32.gmra.mrb[0].mxu0 %v151
    %v232 = vpop.f32.mrb[0].mxu0
    %v233 = vadd.f32 0.0, %v232
    %v234 = vpop.f32.mrb[0].mxu0
    %235 = vmatprep.mubr.f32.mxu0 0.0
    %236 = vmatmul.mubr.f32.gmra.mrb[0].mxu0 %v154
    %v237 = vpop.f32.mrb[0].mxu0
    %v238 = vadd.f32 0.0, %v237
    %v239 = vpop.f32.mrb[0].mxu0
    %240 = vdwg.mxu0
    %241 = vmatprep.subr.mxu0 0.0
    %242 = vmatpush1.msra.mxu0 %v126
    %243 = vmatprep.subr.mxu0 0.0
    %244 = vmatpush1.msra.mxu0 %v131
    %245 = vmatprep.subr.mxu0 0.0
    %246 = vmatpush1.msra.mxu0 %v136
    %247 = vmatprep.subr.mxu0 0.0
    %248 = vmatpush1.msra.mxu0 %v141
    %249 = vmatprep.subr.mxu0 0.0
    %250 = vmatpush1.msra.mxu0 0.0
    %251 = vmatprep.subr.mxu0 0.0
    %252 = vmatpush1.msra.mxu0 0.0
    %253 = vmatprep.subr.mxu0 0.0
    %254 = vmatpush1.msra.mxu0 0.0
    %255 = vmatprep.subr.mxu0 0.0
    %256 = vmatpush1.msra.mxu0 0.0
    %257 = vmatprep.subr.mxu0 0.0
    %258 = vmatpush1.msra.mxu0 0.0
    %259 = vmatprep.subr.mxu0 0.0
    %260 = vmatpush1.msra.mxu0 0.0
    %261 = vmatprep.subr.mxu0 0.0
    %262 = vmatpush1.msra.mxu0 0.0
    %263 = vmatprep.subr.mxu0 0.0
    %264 = vmatpush1.msra.mxu0 0.0
    %265 = vmatprep.subr.mxu0 0.0
    %266 = vmatpush1.msra.mxu0 0.0
    %267 = vmatprep.subr.mxu0 0.0
    %268 = vmatpush1.msra.mxu0 0.0
    %269 = vmatprep.subr.mxu0 0.0
    %270 = vmatpush1.msra.mxu0 0.0
    %271 = vmatprep.subr.mxu0 0.0
    %272 = vmatpush1.msra.mxu0 0.0
    %273 = vmatprep.subr.mxu0 0.0
    %274 = vmatpush1.msra.mxu0 0.0
    %275 = vmatprep.subr.mxu0 0.0
    %276 = vmatpush1.msra.mxu0 0.0
    %277 = vmatprep.subr.mxu0 0.0
    %278 = vmatpush1.msra.mxu0 0.0
    %279 = vmatprep.subr.mxu0 0.0
    %280 = vmatpush1.msra.mxu0 0.0
    %281 = vmatprep.subr.mxu0 0.0
    %282 = vmatpush1.msra.mxu0 0.0
    %283 = vmatprep.subr.mxu0 0.0
    %284 = vmatpush1.msra.mxu0 0.0
    %285 = vmatprep.subr.mxu0 0.0
    %286 = vmatpush1.msra.mxu0 0.0
    %287 = vmatprep.subr.mxu0 0.0
    %288 = vmatpush1.msra.mxu0 0.0
    %289 = vmatprep.subr.mxu0 0.0
    %290 = vmatpush1.msra.mxu0 0.0
    %291 = vmatprep.subr.mxu0 0.0
    %292 = vmatpush1.msra.mxu0 0.0
    %293 = vmatprep.subr.mxu0 0.0
    %294 = vmatpush1.msra.mxu0 0.0
    %295 = vmatprep.subr.mxu0 0.0
    %296 = vmatpush1.msra.mxu0 0.0
    %297 = vmatprep.subr.mxu0 0.0
    %298 = vmatpush1.msra.mxu0 0.0
    %299 = vmatprep.subr.mxu0 0.0
    %300 = vmatpush1.msra.mxu0 0.0
    %301 = vmatprep.subr.mxu0 0.0
    %302 = vmatpush1.msra.mxu0 0.0
    %303 = vmatprep.subr.mxu0 0.0
    %304 = vmatpush1.msra.mxu0 0.0
    %305 = vmatprep.mubr.f32.mxu0 0.0
    %306 = vmatmul.mubr.f32.gmra.mrb[0].mxu0 %v145
    %v307 = vpop.f32.mrb[0].mxu0
    %v308 = vadd.f32 0.0, %v307
    %v309 = vpop.f32.mrb[0].mxu0
    %310 = vmatprep.mubr.f32.mxu0 0.0
    %311 = vmatmul.mubr.f32.gmra.mrb[0].mxu0 %v148
    %v312 = vpop.f32.mrb[0].mxu0
    %v313 = vadd.f32 0.0, %v312
    %v314 = vpop.f32.mrb[0].mxu0
    %315 = vmatprep.mubr.f32.mxu0 0.0
    %316 = vmatmul.mubr.f32.gmra.mrb[0].mxu0 %v151
    %v317 = vpop.f32.mrb[0].mxu0
    %v318 = vadd.f32 0.0, %v317
    %v319 = vpop.f32.mrb[0].mxu0
    %320 = vmatprep.mubr.f32.mxu0 0.0
    %321 = vmatmul.mubr.f32.gmra.mrb[0].mxu0 %v154
    %v322 = vpop.f32.mrb[0].mxu0
    %v323 = vadd.f32 0.0, %v322
    %v324 = vpop.f32.mrb[0].mxu0
    %325 = vdwg.mxu0
    %v326 = vlaneseq
    %v327 = vshrl.u32 %v326, 7
    %v328 = vadd.s32 %v327, 8
    %v329 = vadd.s32 %v327, 16
    %v330 = vadd.s32 %v327, 24
    %v331 = vlaneseq
    %v332 = vand.u32 %v331, 127
    %vm333 = vcmp.eq.s32.totalorder %v327, %v332
    %vm334 = vcmp.eq.s32.totalorder %v328, %v332
    %vm335 = vcmp.eq.s32.totalorder %v329, %v332
    %vm336 = vcmp.eq.s32.totalorder %v330, %v332
    %v337 = vsel %vm333, 1, 0
    %v338 = vsel %vm334, 1, 0
    %v339 = vsel %vm335, 1, 0
    %v340 = vsel %vm336, 1, 0
    %v341 = vcvt.s32.f32 %v337
    %v342 = vcvt.s32.f32 %v338
    %v343 = vcvt.s32.f32 %v339
    %v344 = vcvt.s32.f32 %v340
    %v345 = vadd.f32 %v341, %v42
    %v346 = vadd.f32 %v342, %v43
    %v347 = vadd.f32 %v343, %v44
    %v348 = vadd.f32 %v344, %v45
    %v349 = vmul.f32 %v126, 0.5
    %v350 = vmul.f32 %v131, 0.5
    %v351 = vmul.f32 %v136, 0.5
    %v352 = vmul.f32 %v141, 0.5
    %v353 = vadd.f32 %v345, %v349
    %v354 = vadd.f32 %v346, %v350
    %v355 = vadd.f32 %v347, %v351
    %v356 = vadd.f32 %v348, %v352
    %v357 = vmul.f32 %v223, 0.16666667
    %v358 = vmul.f32 %v228, 0.16666667
    %v359 = vmul.f32 %v233, 0.16666667
    %v360 = vmul.f32 %v238, 0.16666667
    %v361 = vadd.f32 %v353, %v357
    %v362 = vadd.f32 %v354, %v358
    %v363 = vadd.f32 %v355, %v359
    %v364 = vadd.f32 %v356, %v360
    %v365 = vmul.f32 %v341, 0.041666668
    %v366 = vmul.f32 %v342, 0.041666668
    %v367 = vmul.f32 %v343, 0.041666668
    %v368 = vmul.f32 %v344, 0.041666668
    %v369 = vmul.f32 %v42, 0.008333334
    %v370 = vmul.f32 %v43, 0.008333334
    %v371 = vmul.f32 %v44, 0.008333334
    %v372 = vmul.f32 %v45, 0.008333334
    %v373 = vadd.f32 %v365, %v369
    %v374 = vadd.f32 %v366, %v370
    %v375 = vadd.f32 %v367, %v371
    %v376 = vadd.f32 %v368, %v372
    %v377 = vmul.f32 %v126, 0.0013888889
    %v378 = vmul.f32 %v131, 0.0013888889
    %v379 = vmul.f32 %v136, 0.0013888889
    %v380 = vmul.f32 %v141, 0.0013888889
    %v381 = vadd.f32 %v373, %v377
    %v382 = vadd.f32 %v374, %v378
    %v383 = vadd.f32 %v375, %v379
    %v384 = vadd.f32 %v376, %v380
    %v385 = vmul.f32 %v223, 0.0001984127
    %v386 = vmul.f32 %v228, 0.0001984127
    %v387 = vmul.f32 %v233, 0.0001984127
    %v388 = vmul.f32 %v238, 0.0001984127
    %v389 = vadd.f32 %v381, %v385
    %v390 = vadd.f32 %v382, %v386
    %v391 = vadd.f32 %v383, %v387
    %v392 = vadd.f32 %v384, %v388
    %v393 = vmul.f32 %v308, 2.4801588e-05
    %v394 = vmul.f32 %v313, 2.4801588e-05
    %v395 = vmul.f32 %v318, 2.4801588e-05
    %v396 = vmul.f32 %v323, 2.4801588e-05
    %v397 = vadd.f32 %v389, %v393
    %v398 = vadd.f32 %v390, %v394
    %v399 = vadd.f32 %v391, %v395
    %v400 = vadd.f32 %v392, %v396
    %v402 = vsel %vm46, %v397, 0
    %v405 = vsel %vm46, %v398, 0
    %v408 = vsel %vm46, %v399, 0
    %v411 = vsel %vm46, %v400, 0
    %413 = vmatprep.subr.mxu0 0.0
    %414 = vmatpush1.msra.mxu0 %v308
    %415 = vmatprep.subr.mxu0 0.0
    %416 = vmatpush1.msra.mxu0 %v313
    %417 = vmatprep.subr.mxu0 0.0
    %418 = vmatpush1.msra.mxu0 %v318
    %419 = vmatprep.subr.mxu0 0.0
    %420 = vmatpush1.msra.mxu0 %v323
    %421 = vmatprep.subr.mxu0 0.0
    %422 = vmatpush1.msra.mxu0 0.0
    %423 = vmatprep.subr.mxu0 0.0
    %424 = vmatpush1.msra.mxu0 0.0
    %425 = vmatprep.subr.mxu0 0.0
    %426 = vmatpush1.msra.mxu0 0.0
    %427 = vmatprep.subr.mxu0 0.0
    %428 = vmatpush1.msra.mxu0 0.0
    %429 = vmatprep.subr.mxu0 0.0
    %430 = vmatpush1.msra.mxu0 0.0
    %431 = vmatprep.subr.mxu0 0.0
    %432 = vmatpush1.msra.mxu0 0.0
    %433 = vmatprep.subr.mxu0 0.0
    %434 = vmatpush1.msra.mxu0 0.0
    %435 = vmatprep.subr.mxu0 0.0
    %436 = vmatpush1.msra.mxu0 0.0
    %437 = vmatprep.subr.mxu0 0.0
    %438 = vmatpush1.msra.mxu0 0.0
    %439 = vmatprep.subr.mxu0 0.0
    %440 = vmatpush1.msra.mxu0 0.0
    %441 = vmatprep.subr.mxu0 0.0
    %442 = vmatpush1.msra.mxu0 0.0
    %443 = vmatprep.subr.mxu0 0.0
    %444 = vmatpush1.msra.mxu0 0.0
    %445 = vmatprep.subr.mxu0 0.0
    %446 = vmatpush1.msra.mxu0 0.0
    %447 = vmatprep.subr.mxu0 0.0
    %448 = vmatpush1.msra.mxu0 0.0
    %449 = vmatprep.subr.mxu0 0.0
    %450 = vmatpush1.msra.mxu0 0.0
    %451 = vmatprep.subr.mxu0 0.0
    %452 = vmatpush1.msra.mxu0 0.0
    %453 = vmatprep.subr.mxu0 0.0
    %454 = vmatpush1.msra.mxu0 0.0
    %455 = vmatprep.subr.mxu0 0.0
    %456 = vmatpush1.msra.mxu0 0.0
    %457 = vmatprep.subr.mxu0 0.0
    %458 = vmatpush1.msra.mxu0 0.0
    %459 = vmatprep.subr.mxu0 0.0
    %460 = vmatpush1.msra.mxu0 0.0
    %461 = vmatprep.subr.mxu0 0.0
    %462 = vmatpush1.msra.mxu0 0.0
    %463 = vmatprep.subr.mxu0 0.0
    %464 = vmatpush1.msra.mxu0 0.0
    %465 = vmatprep.subr.mxu0 0.0
    %466 = vmatpush1.msra.mxu0 0.0
    %467 = vmatprep.subr.mxu0 0.0
    %468 = vmatpush1.msra.mxu0 0.0
    %469 = vmatprep.subr.mxu0 0.0
    %470 = vmatpush1.msra.mxu0 0.0
    %471 = vmatprep.subr.mxu0 0.0
    %472 = vmatpush1.msra.mxu0 0.0
    %473 = vmatprep.subr.mxu0 0.0
    %474 = vmatpush1.msra.mxu0 0.0
    %475 = vmatprep.subr.mxu0 0.0
    %476 = vmatpush1.msra.mxu0 0.0
    %477 = vmatprep.mubr.f32.mxu0 0.0
    %478 = vmatmul.mubr.f32.gmra.mrb[0].mxu0 %v402
    %v479 = vpop.f32.mrb[0].mxu0
    %v480 = vadd.f32 0.0, %v479
    %v481 = vpop.f32.mrb[0].mxu0
    %482 = vmatprep.mubr.f32.mxu0 0.0
    %483 = vmatmul.mubr.f32.gmra.mrb[0].mxu0 %v405
    %v484 = vpop.f32.mrb[0].mxu0
    %v485 = vadd.f32 0.0, %v484
    %v486 = vpop.f32.mrb[0].mxu0
    %487 = vmatprep.mubr.f32.mxu0 0.0
    %488 = vmatmul.mubr.f32.gmra.mrb[0].mxu0 %v408
    %v489 = vpop.f32.mrb[0].mxu0
    %v490 = vadd.f32 0.0, %v489
    %v491 = vpop.f32.mrb[0].mxu0
    %492 = vmatprep.mubr.f32.mxu0 0.0
    %493 = vmatmul.mubr.f32.gmra.mrb[0].mxu0 %v411
    %v494 = vpop.f32.mrb[0].mxu0
    %v495 = vadd.f32 0.0, %v494
    %v496 = vpop.f32.mrb[0].mxu0
    %497 = vdwg.mxu0
    %v498 = vadd.f32 %v361, %v480
    %v499 = vadd.f32 %v362, %v485
    %v500 = vadd.f32 %v363, %v490
    %v501 = vadd.f32 %v364, %v495
    %v503 = vsel %vm46, %v498, 0
    %v506 = vsel %vm46, %v499, 0
    %v509 = vsel %vm46, %v500, 0
    %v512 = vsel %vm46, %v501, 0
    %514 = vmatprep.subr.mxu0 0.0
    %515 = vmatpush1.msra.mxu0 %v498
    %516 = vmatprep.subr.mxu0 0.0
    %517 = vmatpush1.msra.mxu0 %v499
    %518 = vmatprep.subr.mxu0 0.0
    %519 = vmatpush1.msra.mxu0 %v500
    %520 = vmatprep.subr.mxu0 0.0
    %521 = vmatpush1.msra.mxu0 %v501
    %522 = vmatprep.subr.mxu0 0.0
    %523 = vmatpush1.msra.mxu0 0.0
    %524 = vmatprep.subr.mxu0 0.0
    %525 = vmatpush1.msra.mxu0 0.0
    %526 = vmatprep.subr.mxu0 0.0
    %527 = vmatpush1.msra.mxu0 0.0
    %528 = vmatprep.subr.mxu0 0.0
    %529 = vmatpush1.msra.mxu0 0.0
    %530 = vmatprep.subr.mxu0 0.0
    %531 = vmatpush1.msra.mxu0 0.0
    %532 = vmatprep.subr.mxu0 0.0
    %533 = vmatpush1.msra.mxu0 0.0
    %534 = vmatprep.subr.mxu0 0.0
    %535 = vmatpush1.msra.mxu0 0.0
    %536 = vmatprep.subr.mxu0 0.0
    %537 = vmatpush1.msra.mxu0 0.0
    %538 = vmatprep.subr.mxu0 0.0
    %539 = vmatpush1.msra.mxu0 0.0
    %540 = vmatprep.subr.mxu0 0.0
    %541 = vmatpush1.msra.mxu0 0.0
    %542 = vmatprep.subr.mxu0 0.0
    %543 = vmatpush1.msra.mxu0 0.0
    %544 = vmatprep.subr.mxu0 0.0
    %545 = vmatpush1.msra.mxu0 0.0
    %546 = vmatprep.subr.mxu0 0.0
    %547 = vmatpush1.msra.mxu0 0.0
    %548 = vmatprep.subr.mxu0 0.0
    %549 = vmatpush1.msra.mxu0 0.0
    %550 = vmatprep.subr.mxu0 0.0
    %551 = vmatpush1.msra.mxu0 0.0
    %552 = vmatprep.subr.mxu0 0.0
    %553 = vmatpush1.msra.mxu0 0.0
    %554 = vmatprep.subr.mxu0 0.0
    %555 = vmatpush1.msra.mxu0 0.0
    %556 = vmatprep.subr.mxu0 0.0
    %557 = vmatpush1.msra.mxu0 0.0
    %558 = vmatprep.subr.mxu0 0.0
    %559 = vmatpush1.msra.mxu0 0.0
    %560 = vmatprep.subr.mxu0 0.0
    %561 = vmatpush1.msra.mxu0 0.0
    %562 = vmatprep.subr.mxu0 0.0
    %563 = vmatpush1.msra.mxu0 0.0
    %564 = vmatprep.subr.mxu0 0.0
    %565 = vmatpush1.msra.mxu0 0.0
    %566 = vmatprep.subr.mxu0 0.0
    %567 = vmatpush1.msra.mxu0 0.0
    %568 = vmatprep.subr.mxu0 0.0
    %569 = vmatpush1.msra.mxu0 0.0
    %570 = vmatprep.subr.mxu0 0.0
    %571 = vmatpush1.msra.mxu0 0.0
    %572 = vmatprep.subr.mxu0 0.0
    %573 = vmatpush1.msra.mxu0 0.0
    %574 = vmatprep.subr.mxu0 0.0
    %575 = vmatpush1.msra.mxu0 0.0
    %576 = vmatprep.subr.mxu0 0.0
    %577 = vmatpush1.msra.mxu0 0.0
    %578 = vmatprep.mubr.f32.mxu0 0.0
    %579 = vmatmul.mubr.f32.gmra.mrb[0].mxu0 %v503
    %v580 = vpop.f32.mrb[0].mxu0
    %v581 = vadd.f32 0.0, %v580
    %v582 = vpop.f32.mrb[0].mxu0
    %583 = vmatprep.mubr.f32.mxu0 0.0
    %584 = vmatmul.mubr.f32.gmra.mrb[0].mxu0 %v506
    %v585 = vpop.f32.mrb[0].mxu0
    %v586 = vadd.f32 0.0, %v585
    %v587 = vpop.f32.mrb[0].mxu0
    %588 = vmatprep.mubr.f32.mxu0 0.0
    %589 = vmatmul.mubr.f32.gmra.mrb[0].mxu0 %v509
    %v590 = vpop.f32.mrb[0].mxu0
    %v591 = vadd.f32 0.0, %v590
    %v592 = vpop.f32.mrb[0].mxu0
    %593 = vmatprep.mubr.f32.mxu0 0.0
    %594 = vmatmul.mubr.f32.gmra.mrb[0].mxu0 %v512
    %v595 = vpop.f32.mrb[0].mxu0
    %v596 = vadd.f32 0.0, %v595
    %v597 = vpop.f32.mrb[0].mxu0
    %598 = vdwg.mxu0
    %v600 = vsel %vm46, %v581, 0
    %v603 = vsel %vm46, %v586, 0
    %v606 = vsel %vm46, %v591, 0
    %v609 = vsel %vm46, %v596, 0
    %611 = vmatprep.subr.mxu0 0.0
    %612 = vmatpush1.msra.mxu0 %v581
    %613 = vmatprep.subr.mxu0 0.0
    %614 = vmatpush1.msra.mxu0 %v586
    %615 = vmatprep.subr.mxu0 0.0
    %616 = vmatpush1.msra.mxu0 %v591
    %617 = vmatprep.subr.mxu0 0.0
    %618 = vmatpush1.msra.mxu0 %v596
    %619 = vmatprep.subr.mxu0 0.0
    %620 = vmatpush1.msra.mxu0 0.0
    %621 = vmatprep.subr.mxu0 0.0
    %622 = vmatpush1.msra.mxu0 0.0
    %623 = vmatprep.subr.mxu0 0.0
    %624 = vmatpush1.msra.mxu0 0.0
    %625 = vmatprep.subr.mxu0 0.0
    %626 = vmatpush1.msra.mxu0 0.0
    %627 = vmatprep.subr.mxu0 0.0
    %628 = vmatpush1.msra.mxu0 0.0
    %629 = vmatprep.subr.mxu0 0.0
    %630 = vmatpush1.msra.mxu0 0.0
    %631 = vmatprep.subr.mxu0 0.0
    %632 = vmatpush1.msra.mxu0 0.0
    %633 = vmatprep.subr.mxu0 0.0
    %634 = vmatpush1.msra.mxu0 0.0
    %635 = vmatprep.subr.mxu0 0.0
    %636 = vmatpush1.msra.mxu0 0.0
    %637 = vmatprep.subr.mxu0 0.0
    %638 = vmatpush1.msra.mxu0 0.0
    %639 = vmatprep.subr.mxu0 0.0
    %640 = vmatpush1.msra.mxu0 0.0
    %641 = vmatprep.subr.mxu0 0.0
    %642 = vmatpush1.msra.mxu0 0.0
    %643 = vmatprep.subr.mxu0 0.0
    %644 = vmatpush1.msra.mxu0 0.0
    %645 = vmatprep.subr.mxu0 0.0
    %646 = vmatpush1.msra.mxu0 0.0
    %647 = vmatprep.subr.mxu0 0.0
    %648 = vmatpush1.msra.mxu0 0.0
    %649 = vmatprep.subr.mxu0 0.0
    %650 = vmatpush1.msra.mxu0 0.0
    %651 = vmatprep.subr.mxu0 0.0
    %652 = vmatpush1.msra.mxu0 0.0
    %653 = vmatprep.subr.mxu0 0.0
    %654 = vmatpush1.msra.mxu0 0.0
    %655 = vmatprep.subr.mxu0 0.0
    %656 = vmatpush1.msra.mxu0 0.0
    %657 = vmatprep.subr.mxu0 0.0
    %658 = vmatpush1.msra.mxu0 0.0
    %659 = vmatprep.subr.mxu0 0.0
    %660 = vmatpush1.msra.mxu0 0.0
    %661 = vmatprep.subr.mxu0 0.0
    %662 = vmatpush1.msra.mxu0 0.0
    %663 = vmatprep.subr.mxu0 0.0
    %664 = vmatpush1.msra.mxu0 0.0
    %665 = vmatprep.subr.mxu0 0.0
    %666 = vmatpush1.msra.mxu0 0.0
    %667 = vmatprep.subr.mxu0 0.0
    %668 = vmatpush1.msra.mxu0 0.0
    %669 = vmatprep.subr.mxu0 0.0
    %670 = vmatpush1.msra.mxu0 0.0
    %671 = vmatprep.subr.mxu0 0.0
    %672 = vmatpush1.msra.mxu0 0.0
    %673 = vmatprep.subr.mxu0 0.0
    %674 = vmatpush1.msra.mxu0 0.0
    %675 = vmatprep.mubr.f32.mxu0 0.0
    %676 = vmatmul.mubr.f32.gmra.mrb[0].mxu0 %v600
    %v677 = vpop.f32.mrb[0].mxu0
    %v678 = vadd.f32 0.0, %v677
    %v679 = vpop.f32.mrb[0].mxu0
    %680 = vmatprep.mubr.f32.mxu0 0.0
    %681 = vmatmul.mubr.f32.gmra.mrb[0].mxu0 %v603
    %v682 = vpop.f32.mrb[0].mxu0
    %v683 = vadd.f32 0.0, %v682
    %v684 = vpop.f32.mrb[0].mxu0
    %685 = vmatprep.mubr.f32.mxu0 0.0
    %686 = vmatmul.mubr.f32.gmra.mrb[0].mxu0 %v606
    %v687 = vpop.f32.mrb[0].mxu0
    %v688 = vadd.f32 0.0, %v687
    %v689 = vpop.f32.mrb[0].mxu0
    %690 = vmatprep.mubr.f32.mxu0 0.0
    %691 = vmatmul.mubr.f32.gmra.mrb[0].mxu0 %v609
    %v692 = vpop.f32.mrb[0].mxu0
    %v693 = vadd.f32 0.0, %v692
    %v694 = vpop.f32.mrb[0].mxu0
    %695 = vdwg.mxu0
    %v697 = vsel %vm46, %v678, 0
    %v700 = vsel %vm46, %v683, 0
    %v703 = vsel %vm46, %v688, 0
    %v706 = vsel %vm46, %v693, 0
    %708 = vmatprep.subr.mxu0 0.0
    %709 = vmatpush1.msra.mxu0 %v678
    %710 = vmatprep.subr.mxu0 0.0
    %711 = vmatpush1.msra.mxu0 %v683
    %712 = vmatprep.subr.mxu0 0.0
    %713 = vmatpush1.msra.mxu0 %v688
    %714 = vmatprep.subr.mxu0 0.0
    %715 = vmatpush1.msra.mxu0 %v693
    %716 = vmatprep.subr.mxu0 0.0
    %717 = vmatpush1.msra.mxu0 0.0
    %718 = vmatprep.subr.mxu0 0.0
    %719 = vmatpush1.msra.mxu0 0.0
    %720 = vmatprep.subr.mxu0 0.0
    %721 = vmatpush1.msra.mxu0 0.0
    %722 = vmatprep.subr.mxu0 0.0
    %723 = vmatpush1.msra.mxu0 0.0
    %724 = vmatprep.subr.mxu0 0.0
    %725 = vmatpush1.msra.mxu0 0.0
    %726 = vmatprep.subr.mxu0 0.0
    %727 = vmatpush1.msra.mxu0 0.0
    %728 = vmatprep.subr.mxu0 0.0
    %729 = vmatpush1.msra.mxu0 0.0
    %730 = vmatprep.subr.mxu0 0.0
    %731 = vmatpush1.msra.mxu0 0.0
    %732 = vmatprep.subr.mxu0 0.0
    %733 = vmatpush1.msra.mxu0 0.0
    %734 = vmatprep.subr.mxu0 0.0
    %735 = vmatpush1.msra.mxu0 0.0
    %736 = vmatprep.subr.mxu0 0.0
    %737 = vmatpush1.msra.mxu0 0.0
    %738 = vmatprep.subr.mxu0 0.0
    %739 = vmatpush1.msra.mxu0 0.0
    %740 = vmatprep.subr.mxu0 0.0
    %741 = vmatpush1.msra.mxu0 0.0
    %742 = vmatprep.subr.mxu0 0.0
    %743 = vmatpush1.msra.mxu0 0.0
    %744 = vmatprep.subr.mxu0 0.0
    %745 = vmatpush1.msra.mxu0 0.0
    %746 = vmatprep.subr.mxu0 0.0
    %747 = vmatpush1.msra.mxu0 0.0
    %748 = vmatprep.subr.mxu0 0.0
    %749 = vmatpush1.msra.mxu0 0.0
    %750 = vmatprep.subr.mxu0 0.0
    %751 = vmatpush1.msra.mxu0 0.0
    %752 = vmatprep.subr.mxu0 0.0
    %753 = vmatpush1.msra.mxu0 0.0
    %754 = vmatprep.subr.mxu0 0.0
    %755 = vmatpush1.msra.mxu0 0.0
    %756 = vmatprep.subr.mxu0 0.0
    %757 = vmatpush1.msra.mxu0 0.0
    %758 = vmatprep.subr.mxu0 0.0
    %759 = vmatpush1.msra.mxu0 0.0
    %760 = vmatprep.subr.mxu0 0.0
    %761 = vmatpush1.msra.mxu0 0.0
    %762 = vmatprep.subr.mxu0 0.0
    %763 = vmatpush1.msra.mxu0 0.0
    %764 = vmatprep.subr.mxu0 0.0
    %765 = vmatpush1.msra.mxu0 0.0
    %766 = vmatprep.subr.mxu0 0.0
    %767 = vmatpush1.msra.mxu0 0.0
    %768 = vmatprep.subr.mxu0 0.0
    %769 = vmatpush1.msra.mxu0 0.0
    %770 = vmatprep.subr.mxu0 0.0
    %771 = vmatpush1.msra.mxu0 0.0
    %772 = vmatprep.mubr.f32.mxu0 0.0
    %773 = vmatmul.mubr.f32.gmra.mrb[0].mxu0 %v697
    %v774 = vpop.f32.mrb[0].mxu0
    %v775 = vadd.f32 0.0, %v774
    %v776 = vpop.f32.mrb[0].mxu0
    %777 = vmatprep.mubr.f32.mxu0 0.0
    %778 = vmatmul.mubr.f32.gmra.mrb[0].mxu0 %v700
    %v779 = vpop.f32.mrb[0].mxu0
    %v780 = vadd.f32 0.0, %v779
    %v781 = vpop.f32.mrb[0].mxu0
    %782 = vmatprep.mubr.f32.mxu0 0.0
    %783 = vmatmul.mubr.f32.gmra.mrb[0].mxu0 %v703
    %v784 = vpop.f32.mrb[0].mxu0
    %v785 = vadd.f32 0.0, %v784
    %v786 = vpop.f32.mrb[0].mxu0
    %787 = vmatprep.mubr.f32.mxu0 0.0
    %788 = vmatmul.mubr.f32.gmra.mrb[0].mxu0 %v706
    %v789 = vpop.f32.mrb[0].mxu0
    %v790 = vadd.f32 0.0, %v789
    %v791 = vpop.f32.mrb[0].mxu0
    %792 = vdwg.mxu0
    %v794 = vsel %vm46, %v775, 0
    %v797 = vsel %vm46, %v780, 0
    %v800 = vsel %vm46, %v785, 0
    %v803 = vsel %vm46, %v790, 0
    %805 = vmatprep.subr.mxu0 0.0
    %806 = vmatpush1.msra.mxu0 %v775
    %807 = vmatprep.subr.mxu0 0.0
    %808 = vmatpush1.msra.mxu0 %v780
    %809 = vmatprep.subr.mxu0 0.0
    %810 = vmatpush1.msra.mxu0 %v785
    %811 = vmatprep.subr.mxu0 0.0
    %812 = vmatpush1.msra.mxu0 %v790
    %813 = vmatprep.subr.mxu0 0.0
    %814 = vmatpush1.msra.mxu0 0.0
    %815 = vmatprep.subr.mxu0 0.0
    %816 = vmatpush1.msra.mxu0 0.0
    %817 = vmatprep.subr.mxu0 0.0
    %818 = vmatpush1.msra.mxu0 0.0
    %819 = vmatprep.subr.mxu0 0.0
    %820 = vmatpush1.msra.mxu0 0.0
    %821 = vmatprep.subr.mxu0 0.0
    %822 = vmatpush1.msra.mxu0 0.0
    %823 = vmatprep.subr.mxu0 0.0
    %824 = vmatpush1.msra.mxu0 0.0
    %825 = vmatprep.subr.mxu0 0.0
    %826 = vmatpush1.msra.mxu0 0.0
    %827 = vmatprep.subr.mxu0 0.0
    %828 = vmatpush1.msra.mxu0 0.0
    %829 = vmatprep.subr.mxu0 0.0
    %830 = vmatpush1.msra.mxu0 0.0
    %831 = vmatprep.subr.mxu0 0.0
    %832 = vmatpush1.msra.mxu0 0.0
    %833 = vmatprep.subr.mxu0 0.0
    %834 = vmatpush1.msra.mxu0 0.0
    %835 = vmatprep.subr.mxu0 0.0
    %836 = vmatpush1.msra.mxu0 0.0
    %837 = vmatprep.subr.mxu0 0.0
    %838 = vmatpush1.msra.mxu0 0.0
    %839 = vmatprep.subr.mxu0 0.0
    %840 = vmatpush1.msra.mxu0 0.0
    %841 = vmatprep.subr.mxu0 0.0
    %842 = vmatpush1.msra.mxu0 0.0
    %843 = vmatprep.subr.mxu0 0.0
    %844 = vmatpush1.msra.mxu0 0.0
    %845 = vmatprep.subr.mxu0 0.0
    %846 = vmatpush1.msra.mxu0 0.0
    %847 = vmatprep.subr.mxu0 0.0
    %848 = vmatpush1.msra.mxu0 0.0
    %849 = vmatprep.subr.mxu0 0.0
    %850 = vmatpush1.msra.mxu0 0.0
    %851 = vmatprep.subr.mxu0 0.0
    %852 = vmatpush1.msra.mxu0 0.0
    %853 = vmatprep.subr.mxu0 0.0
    %854 = vmatpush1.msra.mxu0 0.0
    %855 = vmatprep.subr.mxu0 0.0
    %856 = vmatpush1.msra.mxu0 0.0
    %857 = vmatprep.subr.mxu0 0.0
    %858 = vmatpush1.msra.mxu0 0.0
    %859 = vmatprep.subr.mxu0 0.0
    %860 = vmatpush1.msra.mxu0 0.0
    %861 = vmatprep.subr.mxu0 0.0
    %862 = vmatpush1.msra.mxu0 0.0
    %863 = vmatprep.subr.mxu0 0.0
    %864 = vmatpush1.msra.mxu0 0.0
    %865 = vmatprep.subr.mxu0 0.0
    %866 = vmatpush1.msra.mxu0 0.0
    %867 = vmatprep.subr.mxu0 0.0
    %868 = vmatpush1.msra.mxu0 0.0
    %869 = vmatprep.mubr.f32.mxu0 0.0
    %870 = vmatmul.mubr.f32.gmra.mrb[0].mxu0 %v794
    %v871 = vpop.f32.mrb[0].mxu0
    %v872 = vadd.f32 0.0, %v871
    %v873 = vpop.f32.mrb[0].mxu0
    %874 = vmatprep.mubr.f32.mxu0 0.0
    %875 = vmatmul.mubr.f32.gmra.mrb[0].mxu0 %v797
    %v876 = vpop.f32.mrb[0].mxu0
    %v877 = vadd.f32 0.0, %v876
    %v878 = vpop.f32.mrb[0].mxu0
    %879 = vmatprep.mubr.f32.mxu0 0.0
    %880 = vmatmul.mubr.f32.gmra.mrb[0].mxu0 %v800
    %v881 = vpop.f32.mrb[0].mxu0
    %v882 = vadd.f32 0.0, %v881
    %v883 = vpop.f32.mrb[0].mxu0
    %884 = vmatprep.mubr.f32.mxu0 0.0
    %885 = vmatmul.mubr.f32.gmra.mrb[0].mxu0 %v803
    %v886 = vpop.f32.mrb[0].mxu0
    %v887 = vadd.f32 0.0, %v886
    %v888 = vpop.f32.mrb[0].mxu0
    %889 = vdwg.mxu0
    %v891 = vsel %vm46, %v872, 0
    %v894 = vsel %vm46, %v877, 0
    %v897 = vsel %vm46, %v882, 0
    %v900 = vsel %vm46, %v887, 0
    %902 = vmatprep.subr.mxu0 0.0
    %903 = vmatpush1.msra.mxu0 %v872
    %904 = vmatprep.subr.mxu0 0.0
    %905 = vmatpush1.msra.mxu0 %v877
    %906 = vmatprep.subr.mxu0 0.0
    %907 = vmatpush1.msra.mxu0 %v882
    %908 = vmatprep.subr.mxu0 0.0
    %909 = vmatpush1.msra.mxu0 %v887
    %910 = vmatprep.subr.mxu0 0.0
    %911 = vmatpush1.msra.mxu0 0.0
    %912 = vmatprep.subr.mxu0 0.0
    %913 = vmatpush1.msra.mxu0 0.0
    %914 = vmatprep.subr.mxu0 0.0
    %915 = vmatpush1.msra.mxu0 0.0
    %916 = vmatprep.subr.mxu0 0.0
    %917 = vmatpush1.msra.mxu0 0.0
    %918 = vmatprep.subr.mxu0 0.0
    %919 = vmatpush1.msra.mxu0 0.0
    %920 = vmatprep.subr.mxu0 0.0
    %921 = vmatpush1.msra.mxu0 0.0
    %922 = vmatprep.subr.mxu0 0.0
    %923 = vmatpush1.msra.mxu0 0.0
    %924 = vmatprep.subr.mxu0 0.0
    %925 = vmatpush1.msra.mxu0 0.0
    %926 = vmatprep.subr.mxu0 0.0
    %927 = vmatpush1.msra.mxu0 0.0
    %928 = vmatprep.subr.mxu0 0.0
    %929 = vmatpush1.msra.mxu0 0.0
    %930 = vmatprep.subr.mxu0 0.0
    %931 = vmatpush1.msra.mxu0 0.0
    %932 = vmatprep.subr.mxu0 0.0
    %933 = vmatpush1.msra.mxu0 0.0
    %934 = vmatprep.subr.mxu0 0.0
    %935 = vmatpush1.msra.mxu0 0.0
    %936 = vmatprep.subr.mxu0 0.0
    %937 = vmatpush1.msra.mxu0 0.0
    %938 = vmatprep.subr.mxu0 0.0
    %939 = vmatpush1.msra.mxu0 0.0
    %940 = vmatprep.subr.mxu0 0.0
    %941 = vmatpush1.msra.mxu0 0.0
    %942 = vmatprep.subr.mxu0 0.0
    %943 = vmatpush1.msra.mxu0 0.0
    %944 = vmatprep.subr.mxu0 0.0
    %945 = vmatpush1.msra.mxu0 0.0
    %946 = vmatprep.subr.mxu0 0.0
    %947 = vmatpush1.msra.mxu0 0.0
    %948 = vmatprep.subr.mxu0 0.0
    %949 = vmatpush1.msra.mxu0 0.0
    %950 = vmatprep.subr.mxu0 0.0
    %951 = vmatpush1.msra.mxu0 0.0
    %952 = vmatprep.subr.mxu0 0.0
    %953 = vmatpush1.msra.mxu0 0.0
    %954 = vmatprep.subr.mxu0 0.0
    %955 = vmatpush1.msra.mxu0 0.0
    %956 = vmatprep.subr.mxu0 0.0
    %957 = vmatpush1.msra.mxu0 0.0
    %958 = vmatprep.subr.mxu0 0.0
    %959 = vmatpush1.msra.mxu0 0.0
    %960 = vmatprep.subr.mxu0 0.0
    %961 = vmatpush1.msra.mxu0 0.0
    %962 = vmatprep.subr.mxu0 0.0
    %963 = vmatpush1.msra.mxu0 0.0
    %964 = vmatprep.subr.mxu0 0.0
    %965 = vmatpush1.msra.mxu0 0.0
    %966 = vmatprep.mubr.f32.mxu0 0.0
    %967 = vmatmul.mubr.f32.gmra.mrb[0].mxu0 %v891
    %v968 = vpop.f32.mrb[0].mxu0
    %v969 = vadd.f32 0.0, %v968
    %v970 = vpop.f32.mrb[0].mxu0
    %971 = vmatprep.mubr.f32.mxu0 0.0
    %972 = vmatmul.mubr.f32.gmra.mrb[0].mxu0 %v894
    %v973 = vpop.f32.mrb[0].mxu0
    %v974 = vadd.f32 0.0, %v973
    %v975 = vpop.f32.mrb[0].mxu0
    %976 = vmatprep.mubr.f32.mxu0 0.0
    %977 = vmatmul.mubr.f32.gmra.mrb[0].mxu0 %v897
    %v978 = vpop.f32.mrb[0].mxu0
    %v979 = vadd.f32 0.0, %v978
    %v980 = vpop.f32.mrb[0].mxu0
    %981 = vmatprep.mubr.f32.mxu0 0.0
    %982 = vmatmul.mubr.f32.gmra.mrb[0].mxu0 %v900
    %v983 = vpop.f32.mrb[0].mxu0
    %v984 = vadd.f32 0.0, %v983
    %v985 = vpop.f32.mrb[0].mxu0
    %986 = vdwg.mxu0
    %v988 = vsel %vm46, %v969, 0
    %v991 = vsel %vm46, %v974, 0
    %v994 = vsel %vm46, %v979, 0
    %v997 = vsel %vm46, %v984, 0
    %999 = vmatprep.subr.mxu0 0.0
    %1000 = vmatpush1.msra.mxu0 %v969
    %1001 = vmatprep.subr.mxu0 0.0
    %1002 = vmatpush1.msra.mxu0 %v974
    %1003 = vmatprep.subr.mxu0 0.0
    %1004 = vmatpush1.msra.mxu0 %v979
    %1005 = vmatprep.subr.mxu0 0.0
    %1006 = vmatpush1.msra.mxu0 %v984
    %1007 = vmatprep.subr.mxu0 0.0
    %1008 = vmatpush1.msra.mxu0 0.0
    %1009 = vmatprep.subr.mxu0 0.0
    %1010 = vmatpush1.msra.mxu0 0.0
    %1011 = vmatprep.subr.mxu0 0.0
    %1012 = vmatpush1.msra.mxu0 0.0
    %1013 = vmatprep.subr.mxu0 0.0
    %1014 = vmatpush1.msra.mxu0 0.0
    %1015 = vmatprep.subr.mxu0 0.0
    %1016 = vmatpush1.msra.mxu0 0.0
    %1017 = vmatprep.subr.mxu0 0.0
    %1018 = vmatpush1.msra.mxu0 0.0
    %1019 = vmatprep.subr.mxu0 0.0
    %1020 = vmatpush1.msra.mxu0 0.0
    %1021 = vmatprep.subr.mxu0 0.0
    %1022 = vmatpush1.msra.mxu0 0.0
    %1023 = vmatprep.subr.mxu0 0.0
    %1024 = vmatpush1.msra.mxu0 0.0
    %1025 = vmatprep.subr.mxu0 0.0
    %1026 = vmatpush1.msra.mxu0 0.0
    %1027 = vmatprep.subr.mxu0 0.0
    %1028 = vmatpush1.msra.mxu0 0.0
    %1029 = vmatprep.subr.mxu0 0.0
    %1030 = vmatpush1.msra.mxu0 0.0
    %1031 = vmatprep.subr.mxu0 0.0
    %1032 = vmatpush1.msra.mxu0 0.0
    %1033 = vmatprep.subr.mxu0 0.0
    %1034 = vmatpush1.msra.mxu0 0.0
    %1035 = vmatprep.subr.mxu0 0.0
    %1036 = vmatpush1.msra.mxu0 0.0
    %1037 = vmatprep.subr.mxu0 0.0
    %1038 = vmatpush1.msra.mxu0 0.0
    %1039 = vmatprep.subr.mxu0 0.0
    %1040 = vmatpush1.msra.mxu0 0.0
    %1041 = vmatprep.subr.mxu0 0.0
    %1042 = vmatpush1.msra.mxu0 0.0
    %1043 = vmatprep.subr.mxu0 0.0
    %1044 = vmatpush1.msra.mxu0 0.0
    %1045 = vmatprep.subr.mxu0 0.0
    %1046 = vmatpush1.msra.mxu0 0.0
    %1047 = vmatprep.subr.mxu0 0.0
    %1048 = vmatpush1.msra.mxu0 0.0
    %1049 = vmatprep.subr.mxu0 0.0
    %1050 = vmatpush1.msra.mxu0 0.0
    %1051 = vmatprep.subr.mxu0 0.0
    %1052 = vmatpush1.msra.mxu0 0.0
    %1053 = vmatprep.subr.mxu0 0.0
    %1054 = vmatpush1.msra.mxu0 0.0
    %1055 = vmatprep.subr.mxu0 0.0
    %1056 = vmatpush1.msra.mxu0 0.0
    %1057 = vmatprep.subr.mxu0 0.0
    %1058 = vmatpush1.msra.mxu0 0.0
    %1059 = vmatprep.subr.mxu0 0.0
    %1060 = vmatpush1.msra.mxu0 0.0
    %1061 = vmatprep.subr.mxu0 0.0
    %1062 = vmatpush1.msra.mxu0 0.0
    %1063 = vmatprep.mubr.f32.mxu0 0.0
    %1064 = vmatmul.mubr.f32.gmra.mrb[0].mxu0 %v988
    %v1065 = vpop.f32.mrb[0].mxu0
    %v1066 = vadd.f32 0.0, %v1065
    %v1067 = vpop.f32.mrb[0].mxu0
    %1068 = vmatprep.mubr.f32.mxu0 0.0
    %1069 = vmatmul.mubr.f32.gmra.mrb[0].mxu0 %v991
    %v1070 = vpop.f32.mrb[0].mxu0
    %v1071 = vadd.f32 0.0, %v1070
    %v1072 = vpop.f32.mrb[0].mxu0
    %1073 = vmatprep.mubr.f32.mxu0 0.0
    %1074 = vmatmul.mubr.f32.gmra.mrb[0].mxu0 %v994
    %v1075 = vpop.f32.mrb[0].mxu0
    %v1076 = vadd.f32 0.0, %v1075
    %v1077 = vpop.f32.mrb[0].mxu0
    %1078 = vmatprep.mubr.f32.mxu0 0.0
    %1079 = vmatmul.mubr.f32.gmra.mrb[0].mxu0 %v997
    %v1080 = vpop.f32.mrb[0].mxu0
    %v1081 = vadd.f32 0.0, %v1080
    %v1082 = vpop.f32.mrb[0].mxu0
    %1083 = vdwg.mxu0
    %v1085 = vsel %vm46, %v1066, 0
    %v1088 = vsel %vm46, %v1071, 0
    %v1091 = vsel %vm46, %v1076, 0
    %v1094 = vsel %vm46, %v1081, 0
    %1096 = vmatprep.subr.mxu0 0.0
    %1097 = vmatpush1.msra.mxu0 %v1066
    %1098 = vmatprep.subr.mxu0 0.0
    %1099 = vmatpush1.msra.mxu0 %v1071
    %1100 = vmatprep.subr.mxu0 0.0
    %1101 = vmatpush1.msra.mxu0 %v1076
    %1102 = vmatprep.subr.mxu0 0.0
    %1103 = vmatpush1.msra.mxu0 %v1081
    %1104 = vmatprep.subr.mxu0 0.0
    %1105 = vmatpush1.msra.mxu0 0.0
    %1106 = vmatprep.subr.mxu0 0.0
    %1107 = vmatpush1.msra.mxu0 0.0
    %1108 = vmatprep.subr.mxu0 0.0
    %1109 = vmatpush1.msra.mxu0 0.0
    %1110 = vmatprep.subr.mxu0 0.0
    %1111 = vmatpush1.msra.mxu0 0.0
    %1112 = vmatprep.subr.mxu0 0.0
    %1113 = vmatpush1.msra.mxu0 0.0
    %1114 = vmatprep.subr.mxu0 0.0
    %1115 = vmatpush1.msra.mxu0 0.0
    %1116 = vmatprep.subr.mxu0 0.0
    %1117 = vmatpush1.msra.mxu0 0.0
    %1118 = vmatprep.subr.mxu0 0.0
    %1119 = vmatpush1.msra.mxu0 0.0
    %1120 = vmatprep.subr.mxu0 0.0
    %1121 = vmatpush1.msra.mxu0 0.0
    %1122 = vmatprep.subr.mxu0 0.0
    %1123 = vmatpush1.msra.mxu0 0.0
    %1124 = vmatprep.subr.mxu0 0.0
    %1125 = vmatpush1.msra.mxu0 0.0
    %1126 = vmatprep.subr.mxu0 0.0
    %1127 = vmatpush1.msra.mxu0 0.0
    %1128 = vmatprep.subr.mxu0 0.0
    %1129 = vmatpush1.msra.mxu0 0.0
    %1130 = vmatprep.subr.mxu0 0.0
    %1131 = vmatpush1.msra.mxu0 0.0
    %1132 = vmatprep.subr.mxu0 0.0
    %1133 = vmatpush1.msra.mxu0 0.0
    %1134 = vmatprep.subr.mxu0 0.0
    %1135 = vmatpush1.msra.mxu0 0.0
    %1136 = vmatprep.subr.mxu0 0.0
    %1137 = vmatpush1.msra.mxu0 0.0
    %1138 = vmatprep.subr.mxu0 0.0
    %1139 = vmatpush1.msra.mxu0 0.0
    %1140 = vmatprep.subr.mxu0 0.0
    %1141 = vmatpush1.msra.mxu0 0.0
    %1142 = vmatprep.subr.mxu0 0.0
    %1143 = vmatpush1.msra.mxu0 0.0
    %1144 = vmatprep.subr.mxu0 0.0
    %1145 = vmatpush1.msra.mxu0 0.0
    %1146 = vmatprep.subr.mxu0 0.0
    %1147 = vmatpush1.msra.mxu0 0.0
    %1148 = vmatprep.subr.mxu0 0.0
    %1149 = vmatpush1.msra.mxu0 0.0
    %1150 = vmatprep.subr.mxu0 0.0
    %1151 = vmatpush1.msra.mxu0 0.0
    %1152 = vmatprep.subr.mxu0 0.0
    %1153 = vmatpush1.msra.mxu0 0.0
    %1154 = vmatprep.subr.mxu0 0.0
    %1155 = vmatpush1.msra.mxu0 0.0
    %1156 = vmatprep.subr.mxu0 0.0
    %1157 = vmatpush1.msra.mxu0 0.0
    %1158 = vmatprep.subr.mxu0 0.0
    %1159 = vmatpush1.msra.mxu0 0.0
    %1160 = vmatprep.mubr.f32.mxu0 0.0
    %1161 = vmatmul.mubr.f32.gmra.mrb[0].mxu0 %v1085
    %v1162 = vpop.f32.mrb[0].mxu0
    %v1163 = vadd.f32 0.0, %v1162
    %v1164 = vpop.f32.mrb[0].mxu0
    %1165 = vmatprep.mubr.f32.mxu0 0.0
    %1166 = vmatmul.mubr.f32.gmra.mrb[0].mxu0 %v1088
    %v1167 = vpop.f32.mrb[0].mxu0
    %v1168 = vadd.f32 0.0, %v1167
    %v1169 = vpop.f32.mrb[0].mxu0
    %1170 = vmatprep.mubr.f32.mxu0 0.0
    %1171 = vmatmul.mubr.f32.gmra.mrb[0].mxu0 %v1091
    %v1172 = vpop.f32.mrb[0].mxu0
    %v1173 = vadd.f32 0.0, %v1172
    %v1174 = vpop.f32.mrb[0].mxu0
    %1175 = vmatprep.mubr.f32.mxu0 0.0
    %1176 = vmatmul.mubr.f32.gmra.mrb[0].mxu0 %v1094
    %v1177 = vpop.f32.mrb[0].mxu0
    %v1178 = vadd.f32 0.0, %v1177
    %v1179 = vpop.f32.mrb[0].mxu0
    %1180 = vdwg.mxu0
    %v1181 = vld [vmem:[#allocation5] sm:$0xff]
    %v1183 = vsel %vm46, %v1181, 0
    %v1186 = vsel %vm46, %v1163, 0
    %v1189 = vsel %vm46, %v1168, 0
    %v1192 = vsel %vm46, %v1173, 0
    %v1195 = vsel %vm46, %v1178, 0
    %1197 = vmatprep.subr.mxu0 0.0
    %1198 = vmatpush1.xpose.msra.mxu0 %v1186
    %1199 = vmatprep.subr.mxu0 0.0
    %1200 = vmatpush1.xpose.msra.mxu0 %v1189
    %1201 = vmatprep.subr.mxu0 0.0
    %1202 = vmatpush1.xpose.msra.mxu0 %v1192
    %1203 = vmatprep.subr.mxu0 0.0
    %1204 = vmatpush1.xpose.msra.mxu0 %v1195
    %1205 = vmatprep.subr.mxu0 0.0
    %1206 = vmatpush1.xpose.msra.mxu0 0.0
    %1207 = vmatprep.subr.mxu0 0.0
    %1208 = vmatpush1.xpose.msra.mxu0 0.0
    %1209 = vmatprep.subr.mxu0 0.0
    %1210 = vmatpush1.xpose.msra.mxu0 0.0
    %1211 = vmatprep.subr.mxu0 0.0
    %1212 = vmatpush1.xpose.msra.mxu0 0.0
    %1213 = vmatprep.subr.mxu0 0.0
    %1214 = vmatpush1.xpose.msra.mxu0 0.0
    %1215 = vmatprep.subr.mxu0 0.0
    %1216 = vmatpush1.xpose.msra.mxu0 0.0
    %1217 = vmatprep.subr.mxu0 0.0
    %1218 = vmatpush1.xpose.msra.mxu0 0.0
    %1219 = vmatprep.subr.mxu0 0.0
    %1220 = vmatpush1.xpose.msra.mxu0 0.0
    %1221 = vmatprep.subr.mxu0 0.0
    %1222 = vmatpush1.xpose.msra.mxu0 0.0
    %1223 = vmatprep.subr.mxu0 0.0
    %1224 = vmatpush1.xpose.msra.mxu0 0.0
    %1225 = vmatprep.subr.mxu0 0.0
    %1226 = vmatpush1.xpose.msra.mxu0 0.0
    %1227 = vmatprep.subr.mxu0 0.0
    %1228 = vmatpush1.xpose.msra.mxu0 0.0
    %1229 = vmatprep.subr.mxu0 0.0
    %1230 = vmatpush1.xpose.msra.mxu0 0.0
    %1231 = vmatprep.subr.mxu0 0.0
    %1232 = vmatpush1.xpose.msra.mxu0 0.0
    %1233 = vmatprep.subr.mxu0 0.0
    %1234 = vmatpush1.xpose.msra.mxu0 0.0
    %1235 = vmatprep.subr.mxu0 0.0
    %1236 = vmatpush1.xpose.msra.mxu0 0.0
    %1237 = vmatprep.subr.mxu0 0.0
    %1238 = vmatpush1.xpose.msra.mxu0 0.0
    %1239 = vmatprep.subr.mxu0 0.0
    %1240 = vmatpush1.xpose.msra.mxu0 0.0
    %1241 = vmatprep.subr.mxu0 0.0
    %1242 = vmatpush1.xpose.msra.mxu0 0.0
    %1243 = vmatprep.subr.mxu0 0.0
    %1244 = vmatpush1.xpose.msra.mxu0 0.0
    %1245 = vmatprep.subr.mxu0 0.0
    %1246 = vmatpush1.xpose.msra.mxu0 0.0
    %1247 = vmatprep.subr.mxu0 0.0
    %1248 = vmatpush1.xpose.msra.mxu0 0.0
    %1249 = vmatprep.subr.mxu0 0.0
    %1250 = vmatpush1.xpose.msra.mxu0 0.0
    %1251 = vmatprep.subr.mxu0 0.0
    %1252 = vmatpush1.xpose.msra.mxu0 0.0
    %1253 = vmatprep.subr.mxu0 0.0
    %1254 = vmatpush1.xpose.msra.mxu0 0.0
    %1255 = vmatprep.subr.mxu0 0.0
    %1256 = vmatpush1.xpose.msra.mxu0 0.0
    %1257 = vmatprep.subr.mxu0 0.0
    %1258 = vmatpush1.xpose.msra.mxu0 0.0
    %1259 = vmatprep.subr.mxu0 0.0
    %1260 = vmatpush1.xpose.msra.mxu0 0.0
    %1261 = vmatprep.mubr.f32.mxu0 0.0
    %1262 = vmatmul.mubr.f32.gmra.mrb[0].mxu0 %v1183
    %v1263 = vpop.f32.mrb[0].mxu0
    %v1264 = vadd.f32 0.0, %v1263
    %v1265 = vpop.f32.mrb[0].mxu0
    %1266 = vdwg.mxu0
    %1267 = vst.msk [vmem:[#allocation7] sm:$0xff] %vm46, %v1264
    // Predicated region
    $region18: #{tpu_custom_call.1} parent=1 // pred_check
      _
    $region19: #{tpu_custom_call.1} parent=1 // pred_check_branch
      %1269 = sbr.rel (0) target = $region21
    $region20: #{tpu_custom_call.1} parent=1 // pred_region
      %s1271 = ssub.s32 128, 128
      %1272 = vsyncadd [#allocation4], %s1271
      %s1274 = sshll.u32 [#allocation7], 4
      %s1275 = int_to_ptr.vmem [resolvable:$true] %s1274
      %1277 = dma.vmem_to_hbm [thread:$0]  %s1275, 128, %s2, [#allocation4]
    $region21: #{tpu_custom_call.1} parent=1 // pred_fallthru
      _
    // Predicated region
    $region22: #{tpu_custom_call.1} parent=1 // pred_check
      _
    $region23: #{tpu_custom_call.1} parent=1 // pred_check_branch
      %1279 = sbr.rel (0) target = $region25
    $region24: #{tpu_custom_call.1} parent=1 // pred_region
      %1280 = dma.done [#allocation4], 128
    $region25: #{tpu_custom_call.1} parent=1 // pred_fallthru
      _
    %1281 = vsyncpa [#allocation3], 1
    %1282 = vsyncpa [#allocation6], 1
    %1283 = vsyncpa [#allocation4], 1

</llo_original>
